<compile_context>
chip_gen: v6e
topology: v6e:2x2x1
jax: 0.10.0
libtpu: 0.0.40
codegen_flags: <defaults>
</compile_context>

<pallas_src>
import jax
import jax.numpy as jnp
from jax.experimental import pallas as pl
from jax.experimental.pallas import tpu as pltpu


def _round_up(x, m):
    return (x + m - 1) // m * m


def _sublane_multiple(dtype):
    # sublane packing: f32 -> 8, bf16 -> 16, int8/fp8 -> 32
    return {4: 8, 2: 16, 1: 32}.get(jnp.dtype(dtype).itemsize, 8)


def _vmem_capacity_bytes():
    try:
        return int(pltpu.get_tpu_info().vmem_capacity_bytes)
    except Exception:
        return 128 << 20  # v5e/v6e physical VMEM as a conservative default


# ----------------------------- kernels --------------------------------------

def _resident_kernel(x_ref, w1_ref, b1_ref, w3_ref, b3_ref, o_ref):
    """One (tm, D) token tile with both (D, D) weights resident in VMEM."""
    x = x_ref[...]                                             # (tm, D)
    h = jnp.dot(x, w1_ref[...], preferred_element_type=jnp.float32) + b1_ref[...]
    # SiLU in f32 on the EUP; gate product in the activation dtype (bf16 fast path).
    g = (h * jax.nn.sigmoid(h)).astype(x.dtype) * x
    o = jnp.dot(g.astype(w3_ref.dtype), w3_ref[...],
                preferred_element_type=jnp.float32) + b3_ref[...]
    o_ref[...] = o.astype(o_ref.dtype)


def _tiled_kernel(x_ref, xg_ref, w1_ref, b1_ref, w3_ref, b3_ref, o_ref, acc_ref):
    """Feature-tiled path for large D. Grid = (M tiles, K tiles).

    Per K step: h_k = x @ W1[:, k];  g_k = silu(h_k) * x[:, k];
                acc += g_k @ W3[k, :]   (f32 VMEM accumulator)
    """
    k = pl.program_id(1)

    @pl.when(k == 0)
    def _():
        acc_ref[...] = jnp.zeros_like(acc_ref)

    h = jnp.dot(x_ref[...], w1_ref[...],
                preferred_element_type=jnp.float32) + b1_ref[...]
    g = (h * jax.nn.sigmoid(h)).astype(xg_ref.dtype) * xg_ref[...]
    acc_ref[...] += jnp.dot(g.astype(w3_ref.dtype), w3_ref[...],
                            preferred_element_type=jnp.float32)

    @pl.when(k == pl.num_programs(1) - 1)
    def _():
        o_ref[...] = (acc_ref[...] + b3_ref[...]).astype(o_ref.dtype)


# ----------------------------- callers ---------------------------------------

def _call_resident(x2d, w_fc, b1, w_proj, b3, tm_eff, single_buffer_weights, vmem_cap):
    M, D = x2d.shape
    w_it = jnp.dtype(w_fc.dtype).itemsize
    x_it = jnp.dtype(x2d.dtype).itemsize
    grid_m = pl.cdiv(M, tm_eff)

    w_kw = dict(pipeline_mode=pl.Buffered(1)) if single_buffer_weights else {}
    w_bufs = 1 if single_buffer_weights else 2

    needed = (2 * D * D * w_it * w_bufs        # resident weights
              + 2 * 2 * tm_eff * D * x_it      # double-buffered x / out tiles
              + 4 * tm_eff * D * 4             # f32 intermediates headroom
              + 4 * D * 4)                     # biases
    vmem_limit = max(32 << 20,
                     min(int(needed * 1.25) + (4 << 20), int(0.9 * vmem_cap)))

    cost = pl.CostEstimate(
        flops=4 * M * D * D,
        transcendentals=M * D,
        bytes_accessed=2 * M * D * x_it + 2 * D * D * w_it + 2 * D * 4)

    return pl.pallas_call(
        _resident_kernel,
        out_shape=jax.ShapeDtypeStruct((M, D), x2d.dtype),
        grid_spec=pltpu.PrefetchScalarGridSpec(
            num_scalar_prefetch=0,
            grid=(grid_m,),
            in_specs=[
                pl.BlockSpec((tm_eff, D), lambda i: (i, 0)),        # x tile
                pl.BlockSpec((D, D), lambda i: (0, 0), **w_kw),     # W_fc (resident)
                pl.BlockSpec((1, D), lambda i: (0, 0)),             # b_fc
                pl.BlockSpec((D, D), lambda i: (0, 0), **w_kw),     # W_proj (resident)
                pl.BlockSpec((1, D), lambda i: (0, 0)),             # b_proj
            ],
            out_specs=pl.BlockSpec((tm_eff, D), lambda i: (i, 0)),
        ),
        compiler_params=pltpu.CompilerParams(
            dimension_semantics=("parallel",),
            vmem_limit_bytes=vmem_limit),
        cost_estimate=cost,
    )(x2d, w_fc, b1, w_proj, b3)


def _call_tiled(x2d, w_fc, b1, w_proj, b3, tm_eff, tk, vmem_cap):
    M, D = x2d.shape
    w_it = jnp.dtype(w_fc.dtype).itemsize
    x_it = jnp.dtype(x2d.dtype).itemsize
    grid = (pl.cdiv(M, tm_eff), D // tk)

    needed = (2 * tm_eff * D * x_it        # x full-width tile (double-buffered over i)
              + 2 * tm_eff * tk * x_it     # x gate strip
              + 2 * D * tk * w_it          # W_fc strip (streamed)
              + 2 * tk * D * w_it          # W_proj strip (streamed)
              + tm_eff * D * 4             # f32 accumulator
              + 2 * tm_eff * D * x_it      # out tile
              + 4 * D * 4)
    vmem_limit = max(32 << 20,
                     min(int(needed * 1.25) + (4 << 20), int(0.9 * vmem_cap)))

    cost = pl.CostEstimate(
        flops=4 * M * D * D,
        transcendentals=M * D,
        bytes_accessed=(3 * M * D * x_it
                        + pl.cdiv(M, tm_eff) * 2 * D * D * w_it + 2 * D * 4))

    return pl.pallas_call(
        _tiled_kernel,
        out_shape=jax.ShapeDtypeStruct((M, D), x2d.dtype),
        grid_spec=pltpu.PrefetchScalarGridSpec(
            num_scalar_prefetch=0,
            grid=grid,
            in_specs=[
                pl.BlockSpec((tm_eff, D), lambda i, k: (i, 0)),    # x (full width)
                pl.BlockSpec((tm_eff, tk), lambda i, k: (i, k)),   # x gate strip
                pl.BlockSpec((D, tk), lambda i, k: (0, k)),        # W_fc strip
                pl.BlockSpec((1, tk), lambda i, k: (0, k)),        # b_fc strip
                pl.BlockSpec((tk, D), lambda i, k: (k, 0)),        # W_proj strip
                pl.BlockSpec((1, D), lambda i, k: (0, 0)),         # b_proj
            ],
            out_specs=pl.BlockSpec((tm_eff, D), lambda i, k: (i, 0)),
            scratch_shapes=[pltpu.VMEM((tm_eff, D), jnp.float32)],
        ),
        compiler_params=pltpu.CompilerParams(
            dimension_semantics=("parallel", "arbitrary"),
            vmem_limit_bytes=vmem_limit),
        cost_estimate=cost,
    )(x2d, x2d, w_fc, b1, w_proj, b3)


def halfgate_mlp(x, w_fc, b_fc, w_proj, b_proj, *, tm=None, force_tiled=False, tk=None):
    """x: (B, S, D).  w_*: (D, D) stored [D_in, D_out].  b_*: (D,)."""
    B, S, D = x.shape
    assert w_fc.shape == (D, D) and w_proj.shape == (D, D), \
        "HalfGateMLP gate requires in_features == n_embd"
    M = B * S
    x2d = x.reshape(M, D)
    b1 = b_fc.astype(jnp.float32).reshape(1, D)
    b3 = b_proj.astype(jnp.float32).reshape(1, D)

    vmem_cap = _vmem_capacity_bytes()
    w_it = jnp.dtype(w_fc.dtype).itemsize

    # Token tile: large tm for small D (only the x/out tiles grow, weights are
    # resident), rounded to the dtype's sublane packing.
    if tm is None:
        tm = 1024 if D <= 512 else (512 if D <= 1024 else 256)
    sub = _sublane_multiple(x.dtype)
    tm_eff = _round_up(max(sub, min(tm, _round_up(M, sub))), sub)
    # v7x has 2 TensorCores: keep >= 2 steps on the "parallel" M axis.
    if pl.cdiv(M, tm_eff) < 2 and M > sub:
        tm_eff = _round_up(pl.cdiv(M, 2), sub)

    # Resident fully-fused path while single-buffered weights stay under ~40%
    # of this generation's VMEM; otherwise stream weight strips over features.
    resident_w_bytes = 2 * D * D * w_it
    use_tiled = force_tiled or (resident_w_bytes > 0.4 * vmem_cap and D % 128 == 0)

    if use_tiled:
        if tk is None:
            tk = next((t for t in (512, 256, 128) if D % t == 0), None)
        assert tk is not None and D % tk == 0 and tk % 128 == 0
        out2d = _call_tiled(x2d, w_fc, b1, w_proj, b3, tm_eff, tk, vmem_cap)
    else:
        try:
            out2d = _call_resident(x2d, w_fc, b1, w_proj, b3, tm_eff,
                                   single_buffer_weights=True, vmem_cap=vmem_cap)
        except Exception:
            # Fallback if this JAX build rejects pl.Buffered(1) on the top-level
            # pipeline: plain (double-buffered) weight specs, same semantics.
            out2d = _call_resident(x2d, w_fc, b1, w_proj, b3, tm_eff,
                                   single_buffer_weights=False, vmem_cap=vmem_cap)
    return out2d.reshape(B, S, D)


def _reference(x, w_fc, b_fc, w_proj, b_proj):
    """Pure-JAX reference with the same precision recipe as the kernel."""
    B, S, D = x.shape
    x2 = x.reshape(-1, D)
    h = jnp.dot(x2, w_fc, preferred_element_type=jnp.float32) + b_fc.astype(jnp.float32)
    g = (h * jax.nn.sigmoid(h)).astype(x.dtype) * x2
    o = (jnp.dot(g.astype(w_proj.dtype), w_proj, preferred_element_type=jnp.float32)
         + b_proj.astype(jnp.float32))
    return o.astype(x.dtype).reshape(B, S, D)


if __name__ == "__main__":
    key = jax.random.PRNGKey(0)
    k_x, k_w1, k_b1, k_w3, k_b3, k_x2, k_w12, k_w32 = jax.random.split(key, 8)

    # --- resident-weight path (D=128); M=48 also exercises the partial last
    #     M block (no pad/slice) and the >=2-grid-step rule. ---
    B, S, D = 2, 24, 128
    x = jax.random.normal(k_x, (B, S, D), dtype=jnp.float32).astype(jnp.bfloat16)
    std = 1.0 / (D ** 0.5)
    w_fc = (jax.random.normal(k_w1, (D, D)) * std).astype(jnp.bfloat16)
    b_fc = jax.random.normal(k_b1, (D,)) * 0.01
    w_proj = (jax.random.normal(k_w3, (D, D)) * std).astype(jnp.bfloat16)
    b_proj = jax.random.normal(k_b3, (D,)) * 0.01

    out = jax.block_until_ready(halfgate_mlp(x, w_fc, b_fc, w_proj, b_proj))
    ref = _reference(x, w_fc, b_fc, w_proj, b_proj)
    assert out.shape == x.shape and out.dtype == x.dtype
    err = float(jnp.max(jnp.abs(out.astype(jnp.float32) - ref.astype(jnp.float32))))
    assert err <= 5e-2, f"resident path mismatch vs reference, max abs err = {err}"

    # --- feature-tiled path (forced, tk=128) to exercise the large-D code path ---
    B2, S2, D2 = 2, 8, 256
    x2 = jax.random.normal(k_x2, (B2, S2, D2), dtype=jnp.float32).astype(jnp.bfloat16)
    std2 = 1.0 / (D2 ** 0.5)
    w_fc2 = (jax.random.normal(k_w12, (D2, D2)) * std2).astype(jnp.bfloat16)
    w_proj2 = (jax.random.normal(k_w32, (D2, D2)) * std2).astype(jnp.bfloat16)
    b_fc2 = jnp.zeros((D2,), jnp.float32)
    b_proj2 = jnp.zeros((D2,), jnp.float32)

    out2 = jax.block_until_ready(
        halfgate_mlp(x2, w_fc2, b_fc2, w_proj2, b_proj2, force_tiled=True, tk=128))
    ref2 = _reference(x2, w_fc2, b_fc2, w_proj2, b_proj2)
    err2 = float(jnp.max(jnp.abs(out2.astype(jnp.float32) - ref2.astype(jnp.float32))))
    assert err2 <= 5e-2, f"tiled path mismatch vs reference, max abs err = {err2}"

    print("KERNEL_OK")
</pallas_src>

<mosaic_0001>
module attributes {stable_mosaic.version = 11 : i64} {
  func.func @_resident_kernel(%arg0: i32, %arg1: memref<32x128xbf16, #tpu.memory_space<vmem>>, %arg2: memref<128x128xbf16, #tpu.memory_space<vmem>>, %arg3: memref<1x128xf32, #tpu.memory_space<vmem>>, %arg4: memref<128x128xbf16, #tpu.memory_space<vmem>>, %arg5: memref<1x128xf32, #tpu.memory_space<vmem>>, %arg6: memref<32x128xbf16, #tpu.memory_space<vmem>>) attributes {dimension_semantics = [#tpu.dimension_semantics<parallel>], iteration_bounds = array<i64: 2>, scalar_prefetch = 0 : i64, scratch_operands = 0 : i64, tpu.core_type = #tpu.core_type<tc>, window_params = [{transform_indices = @transform_0, window_bounds = array<i64: 32, 128>}, {pipeline_mode = #tpu.pipeline_mode<synchronous>, transform_indices = @transform_1, window_bounds = array<i64: 128, 128>}, {pipeline_mode = #tpu.pipeline_mode<synchronous>, transform_indices = @transform_2, window_bounds = array<i64: 1, 128>}, {pipeline_mode = #tpu.pipeline_mode<synchronous>, transform_indices = @transform_3, window_bounds = array<i64: 128, 128>}, {pipeline_mode = #tpu.pipeline_mode<synchronous>, transform_indices = @transform_4, window_bounds = array<i64: 1, 128>}, {transform_indices = @transform_5, window_bounds = array<i64: 32, 128>}]} {
    %c0 = arith.constant 0 : index
    %c0_0 = arith.constant 0 : index
    %0 = vector.load %arg1[%c0, %c0_0] : memref<32x128xbf16, #tpu.memory_space<vmem>>, vector<32x128xbf16>
    %c0_1 = arith.constant 0 : index
    %c0_2 = arith.constant 0 : index
    %1 = vector.load %arg2[%c0_1, %c0_2] : memref<128x128xbf16, #tpu.memory_space<vmem>>, vector<128x128xbf16>
    %cst = arith.constant dense<0.000000e+00> : vector<32x128xf32>
    %2 = tpu.matmul %0, %1, %cst {dimension_numbers = #tpu.dot_dimension_numbers<[1], [0], [0], [1], [0, 0, 1, 1], [], []>} : vector<32x128xbf16>, vector<128x128xbf16>, vector<32x128xf32> -> vector<32x128xf32>
    %c0_3 = arith.constant 0 : index
    %c0_4 = arith.constant 0 : index
    %3 = vector.load %arg3[%c0_3, %c0_4] : memref<1x128xf32, #tpu.memory_space<vmem>>, vector<1x128xf32>
    %4 = vector.broadcast %3 : vector<1x128xf32> to vector<32x128xf32>
    %5 = arith.addf %2, %4 : vector<32x128xf32>
    %6 = arith.negf %5 : vector<32x128xf32>
    %7 = math.exp %6 : vector<32x128xf32>
    %cst_5 = arith.constant 1.000000e+00 : f32
    %8 = vector.broadcast %cst_5 : f32 to vector<32x128xf32>
    %9 = arith.addf %8, %7 : vector<32x128xf32>
    %10 = arith.divf %8, %9 : vector<32x128xf32>
    %11 = arith.mulf %5, %10 : vector<32x128xf32>
    %12 = arith.truncf %11 : vector<32x128xf32> to vector<32x128xbf16>
    %13 = arith.mulf %12, %0 : vector<32x128xbf16>
    %c0_6 = arith.constant 0 : index
    %c0_7 = arith.constant 0 : index
    %14 = vector.load %arg4[%c0_6, %c0_7] : memref<128x128xbf16, #tpu.memory_space<vmem>>, vector<128x128xbf16>
    %cst_8 = arith.constant dense<0.000000e+00> : vector<32x128xf32>
    %15 = tpu.matmul %13, %14, %cst_8 {dimension_numbers = #tpu.dot_dimension_numbers<[1], [0], [0], [1], [0, 0, 1, 1], [], []>} : vector<32x128xbf16>, vector<128x128xbf16>, vector<32x128xf32> -> vector<32x128xf32>
    %c0_9 = arith.constant 0 : index
    %c0_10 = arith.constant 0 : index
    %16 = vector.load %arg5[%c0_9, %c0_10] : memref<1x128xf32, #tpu.memory_space<vmem>>, vector<1x128xf32>
    %17 = vector.broadcast %16 : vector<1x128xf32> to vector<32x128xf32>
    %18 = arith.addf %15, %17 : vector<32x128xf32>
    %19 = arith.truncf %18 : vector<32x128xf32> to vector<32x128xbf16>
    %c0_11 = arith.constant 0 : index
    %c0_12 = arith.constant 0 : index
    %20 = vector.load %arg6[%c0_11, %c0_12] : memref<32x128xbf16, #tpu.memory_space<vmem>>, vector<32x128xbf16>
    tpu.vector_store %arg6[%c0_11, %c0_12], %19 {strides = array<i32>} : memref<32x128xbf16, #tpu.memory_space<vmem>>, vector<32x128xbf16>,
    return
  }
  func.func @transform_0(%arg0: i32) -> (i32, i32) {
    %c0_i32 = arith.constant 0 : i32
    %c0_i32_0 = arith.constant 0 : i32
    return %arg0, %c0_i32 : i32, i32
  }
  func.func @transform_1(%arg0: i32) -> (i32, i32) {
    %c0_i32 = arith.constant 0 : i32
    %c0_i32_0 = arith.constant 0 : i32
    %c0_i32_1 = arith.constant 0 : i32
    return %c0_i32, %c0_i32_0 : i32, i32
  }
  func.func @transform_2(%arg0: i32) -> (i32, i32) {
    %c0_i32 = arith.constant 0 : i32
    %c0_i32_0 = arith.constant 0 : i32
    %c0_i32_1 = arith.constant 0 : i32
    return %c0_i32, %c0_i32_0 : i32, i32
  }
  func.func @transform_3(%arg0: i32) -> (i32, i32) {
    %c0_i32 = arith.constant 0 : i32
    %c0_i32_0 = arith.constant 0 : i32
    %c0_i32_1 = arith.constant 0 : i32
    return %c0_i32, %c0_i32_0 : i32, i32
  }
  func.func @transform_4(%arg0: i32) -> (i32, i32) {
    %c0_i32 = arith.constant 0 : i32
    %c0_i32_0 = arith.constant 0 : i32
    %c0_i32_1 = arith.constant 0 : i32
    return %c0_i32, %c0_i32_0 : i32, i32
  }
  func.func @transform_5(%arg0: i32) -> (i32, i32) {
    %c0_i32 = arith.constant 0 : i32
    %c0_i32_0 = arith.constant 0 : i32
    return %arg0, %c0_i32 : i32, i32
  }
}

module attributes {stable_mosaic.version = 11 : i64} {
  func.func @_resident_kernel(%arg0: i32, %arg1: memref<32x128xbf16, #tpu.memory_space<vmem>>, %arg2: memref<128x128xbf16, #tpu.memory_space<vmem>>, %arg3: memref<1x128xf32, #tpu.memory_space<vmem>>, %arg4: memref<128x128xbf16, #tpu.memory_space<vmem>>, %arg5: memref<1x128xf32, #tpu.memory_space<vmem>>, %arg6: memref<32x128xbf16, #tpu.memory_space<vmem>>) attributes {dimension_semantics = [#tpu.dimension_semantics<parallel>], iteration_bounds = array<i64: 2>, scalar_prefetch = 0 : i64, scratch_operands = 0 : i64, tpu.core_type = #tpu.core_type<tc>, window_params = [{transform_indices = @transform_0, window_bounds = array<i64: 32, 128>}, {pipeline_mode = #tpu.pipeline_mode<synchronous>, transform_indices = @transform_1, window_bounds = array<i64: 128, 128>}, {pipeline_mode = #tpu.pipeline_mode<synchronous>, transform_indices = @transform_2, window_bounds = array<i64: 1, 128>}, {pipeline_mode = #tpu.pipeline_mode<synchronous>, transform_indices = @transform_3, window_bounds = array<i64: 128, 128>}, {pipeline_mode = #tpu.pipeline_mode<synchronous>, transform_indices = @transform_4, window_bounds = array<i64: 1, 128>}, {transform_indices = @transform_5, window_bounds = array<i64: 32, 128>}]} {
    %c0 = arith.constant 0 : index
    %c0_0 = arith.constant 0 : index
    %0 = vector.load %arg1[%c0, %c0_0] : memref<32x128xbf16, #tpu.memory_space<vmem>>, vector<32x128xbf16>
    %c0_1 = arith.constant 0 : index
    %c0_2 = arith.constant 0 : index
    %1 = vector.load %arg2[%c0_1, %c0_2] : memref<128x128xbf16, #tpu.memory_space<vmem>>, vector<128x128xbf16>
    %cst = arith.constant dense<0.000000e+00> : vector<32x128xf32>
    %2 = tpu.matmul %0, %1, %cst {dimension_numbers = #tpu.dot_dimension_numbers<[1], [0], [0], [1], [0, 0, 1, 1], [], []>} : vector<32x128xbf16>, vector<128x128xbf16>, vector<32x128xf32> -> vector<32x128xf32>
    %c0_3 = arith.constant 0 : index
    %c0_4 = arith.constant 0 : index
    %3 = vector.load %arg3[%c0_3, %c0_4] : memref<1x128xf32, #tpu.memory_space<vmem>>, vector<1x128xf32>
    %4 = vector.broadcast %3 : vector<1x128xf32> to vector<32x128xf32>
    %5 = arith.addf %2, %4 : vector<32x128xf32>
    %6 = arith.negf %5 : vector<32x128xf32>
    %7 = math.exp %6 : vector<32x128xf32>
    %cst_5 = arith.constant 1.000000e+00 : f32
    %8 = vector.broadcast %cst_5 : f32 to vector<32x128xf32>
    %9 = arith.addf %8, %7 : vector<32x128xf32>
    %10 = arith.divf %8, %9 : vector<32x128xf32>
    %11 = arith.mulf %5, %10 : vector<32x128xf32>
    %12 = arith.truncf %11 : vector<32x128xf32> to vector<32x128xbf16>
    %13 = arith.mulf %12, %0 : vector<32x128xbf16>
    %c0_6 = arith.constant 0 : index
    %c0_7 = arith.constant 0 : index
    %14 = vector.load %arg4[%c0_6, %c0_7] : memref<128x128xbf16, #tpu.memory_space<vmem>>, vector<128x128xbf16>
    %cst_8 = arith.constant dense<0.000000e+00> : vector<32x128xf32>
    %15 = tpu.matmul %13, %14, %cst_8 {dimension_numbers = #tpu.dot_dimension_numbers<[1], [0], [0], [1], [0, 0, 1, 1], [], []>} : vector<32x128xbf16>, vector<128x128xbf16>, vector<32x128xf32> -> vector<32x128xf32>
    %c0_9 = arith.constant 0 : index
    %c0_10 = arith.constant 0 : index
    %16 = vector.load %arg5[%c0_9, %c0_10] : memref<1x128xf32, #tpu.memory_space<vmem>>, vector<1x128xf32>
    %17 = vector.broadcast %16 : vector<1x128xf32> to vector<32x128xf32>
    %18 = arith.addf %15, %17 : vector<32x128xf32>
    %19 = arith.truncf %18 : vector<32x128xf32> to vector<32x128xbf16>
    %c0_11 = arith.constant 0 : index
    %c0_12 = arith.constant 0 : index
    %20 = vector.load %arg6[%c0_11, %c0_12] : memref<32x128xbf16, #tpu.memory_space<vmem>>, vector<32x128xbf16>
    tpu.vector_store %arg6[%c0_11, %c0_12], %19 {strides = array<i32>} : memref<32x128xbf16, #tpu.memory_space<vmem>>, vector<32x128xbf16>,
    return
  }
  func.func @transform_0(%arg0: i32) -> (i32, i32) {
    %c0_i32 = arith.constant 0 : i32
    %c0_i32_0 = arith.constant 0 : i32
    return %arg0, %c0_i32 : i32, i32
  }
  func.func @transform_1(%arg0: i32) -> (i32, i32) {
    %c0_i32 = arith.constant 0 : i32
    %c0_i32_0 = arith.constant 0 : i32
    %c0_i32_1 = arith.constant 0 : i32
    return %c0_i32, %c0_i32_0 : i32, i32
  }
  func.func @transform_2(%arg0: i32) -> (i32, i32) {
    %c0_i32 = arith.constant 0 : i32
    %c0_i32_0 = arith.constant 0 : i32
    %c0_i32_1 = arith.constant 0 : i32
    return %c0_i32, %c0_i32_0 : i32, i32
  }
  func.func @transform_3(%arg0: i32) -> (i32, i32) {
    %c0_i32 = arith.constant 0 : i32
    %c0_i32_0 = arith.constant 0 : i32
    %c0_i32_1 = arith.constant 0 : i32
    return %c0_i32, %c0_i32_0 : i32, i32
  }
  func.func @transform_4(%arg0: i32) -> (i32, i32) {
    %c0_i32 = arith.constant 0 : i32
    %c0_i32_0 = arith.constant 0 : i32
    %c0_i32_1 = arith.constant 0 : i32
    return %c0_i32, %c0_i32_0 : i32, i32
  }
  func.func @transform_5(%arg0: i32) -> (i32, i32) {
    %c0_i32 = arith.constant 0 : i32
    %c0_i32_0 = arith.constant 0 : i32
    return %arg0, %c0_i32 : i32, i32
  }
}

</mosaic_0001>

<llo_original>
// kernel: tpu_custom_call.1
$region0: #{tpu_custom_call.1}
  #allocation0 [shape = 'u32[]', space=smem, size = 0x4, offset = 0x4, fixed_abs, tag = 'smem constant byte address 0x4 - core index']
  #allocation1 [shape = 'u32[144,128]{1,0:T(1,128)}', space=vmem, size = 0x12000, scoped, tag = 'internal scratch']
  %s0 = inlined_call_operand.hbm [shape: bf16[48,128], index: 0, kind: input, shape index: {}]
  %s1 = inlined_call_operand.hbm [shape: bf16[128,128], index: 1, kind: input, shape index: {}]
  %s2 = inlined_call_operand.vmem [shape: f32[1,128], index: 2, kind: input, shape index: {}]
  %s3 = inlined_call_operand.hbm [shape: bf16[128,128], index: 3, kind: input, shape index: {}]
  %s4 = inlined_call_operand.vmem [shape: f32[1,128], index: 4, kind: input, shape index: {}]
  %s5 = inlined_call_operand.hbm [shape: bf16[48,128], index: 5, kind: output, shape index: {}]
  %s6 = sld [smem:[#allocation0]]
  $region65: #{tpu_custom_call.1} parent=0
    _
  %s8 = ssub.s32 1, %s6
  %s9 = scalar_select 0, %s8, %s6
  $region1: #{tpu_custom_call.1} parent=0
    #allocation2 [shape = 'u8[16384]{0}', space=vmem, size = 0x4000, scoped, tag = 'input window, operand 0']
    #allocation3 [shape = 's32[2]{0}', space=sflag, size = 0x8, scoped, tag = 'scoped memory for tpu_custom_call.1']
    #allocation4 [shape = 's32[2]{0}', space=sflag, size = 0x8, scoped, tag = 'scoped memory for tpu_custom_call.1']
    #allocation5 [shape = 'u8[32768]{0}', space=vmem, size = 0x8000, scoped, tag = 'input window, operand 1, single buffered']
    #allocation6 [shape = 's32[1]{0}', space=sflag, size = 0x4, scoped, tag = 'scoped memory for tpu_custom_call.1']
    #allocation7 [shape = 'u8[32768]{0}', space=vmem, size = 0x8000, scoped, tag = 'input window, operand 3, single buffered']
    #allocation8 [shape = 'u8[16384]{0}', space=vmem, size = 0x4000, scoped, tag = 'output window, operand 0']
    %10 = vsyncpa [#allocation3], 0
    %s11 = scalar_lea.sflag [#allocation3], 1
    %12 = vsyncpa %s11, 0
    %13 = vsyncpa [#allocation6], 0
    %14 = vsyncpa [#allocation4], 0
    %s15 = scalar_lea.sflag [#allocation4], 1
    %16 = vsyncpa %s15, 0
    loop: start=0, step=1, limit=4
    $region2: #{tpu_custom_call.1} parent=1 // loop_pre_header
      _
    $region3: #{tpu_custom_call.1} parent=1 // loop_header
      %s18 = sphi 0, %s22
      %p19 = scmp.ge.s32.totalorder %s18, 4
      %s28 = sphi 0, %s30
      %s31 = sphi 0, %s28
      %s32 = sphi 0, %s31
      %s48 = sphi 0, %s32
      %s52 = sphi 0, %s52
      %s54 = sphi 0, %s52
      %s55 = sphi 0, %s54
      %s69 = sphi 0, %s55
      %s73 = sphi 0, %s73
      %s75 = sphi 0, %s73
      %s76 = sphi 0, %s75
      %s90 = sphi 0, %s76
      %s94 = sphi 0, %s94
      %s96 = sphi 0, %s94
      %s97 = sphi 0, %s96
      %s111 = sphi 0, %s97
      %s115 = sphi 0, %s115
      %s117 = sphi 0, %s115
      %s118 = sphi 0, %s117
      %s132 = sphi 0, %s118
      %s138 = sphi 0, %s140
      %s141 = sphi 0, %s138
      %s142 = sphi 0, %s141
      %s158 = sphi 0, %s142
    $region4: #{tpu_custom_call.1} parent=1 // loop_header_branch
      %21 = sbr.rel (%p19) target = $region8
    $region5: #{tpu_custom_call.1} parent=1 // loop_body
      %s23 = ssub.s32 %s18, 1
      %s24 = ssub.s32 %s18, 2
      %s25 = sadd.s32 %s18, 1
      %s26 = ssub.s32 %s18, %s25
      %p27 = scmp.eq.s32.totalorder %s26, 0
      %s29 = sadd.s32 %s28, 1
      %s30 = scalar_select %p27, %s28, %s29
      %p33 = pneg %p27
      %p34 = scmp.eq.s32.totalorder %s18, 1
      %p35 = por %p33, %p34
      %p36 = scmp.ne.s32.totalorder %s28, %s31
      %p37 = scmp.eq.s32.totalorder %s18, 0
      %p38 = por %p36, %p37
      %p39 = scmp.ne.s32.totalorder %s28, %s31
      %p40 = scmp.eq.s32.totalorder %s23, 1
      %p41 = por %p39, %p40
      %p42 = scmp.ne.s32.totalorder %s31, %s32
      %p43 = scmp.eq.s32.totalorder %s23, 0
      %p44 = por %p42, %p43
      %p45 = scmp.ne.s32.totalorder %s31, %s32
      %p46 = scmp.eq.s32.totalorder %s24, 1
      %p47 = por %p45, %p46
      %p49 = scmp.ne.s32.totalorder %s32, %s48
      %p50 = scmp.eq.s32.totalorder %s24, 0
      %p51 = por %p49, %p50
      %s53 = sadd.s32 %s52, 1
      %p56 = scmp.eq.s32.totalorder %s18, 1
      %p57 = scmp.ne.s32.totalorder %s52, %s54
      %p58 = scmp.eq.s32.totalorder %s18, 0
      %p59 = por %p57, %p58
      %p60 = scmp.ne.s32.totalorder %s52, %s54
      %p61 = scmp.eq.s32.totalorder %s23, 1
      %p62 = por %p60, %p61
      %p63 = scmp.ne.s32.totalorder %s54, %s55
      %p64 = scmp.eq.s32.totalorder %s23, 0
      %p65 = por %p63, %p64
      %p66 = scmp.ne.s32.totalorder %s54, %s55
      %p67 = scmp.eq.s32.totalorder %s24, 1
      %p68 = por %p66, %p67
      %p70 = scmp.ne.s32.totalorder %s55, %s69
      %p71 = scmp.eq.s32.totalorder %s24, 0
      %p72 = por %p70, %p71
      %s74 = sadd.s32 %s73, 1
      %p77 = scmp.eq.s32.totalorder %s18, 1
      %p78 = scmp.ne.s32.totalorder %s73, %s75
      %p79 = scmp.eq.s32.totalorder %s18, 0
      %p80 = por %p78, %p79
      %p81 = scmp.ne.s32.totalorder %s73, %s75
      %p82 = scmp.eq.s32.totalorder %s23, 1
      %p83 = por %p81, %p82
      %p84 = scmp.ne.s32.totalorder %s75, %s76
      %p85 = scmp.eq.s32.totalorder %s23, 0
      %p86 = por %p84, %p85
      %p87 = scmp.ne.s32.totalorder %s75, %s76
      %p88 = scmp.eq.s32.totalorder %s24, 1
      %p89 = por %p87, %p88
      %p91 = scmp.ne.s32.totalorder %s76, %s90
      %p92 = scmp.eq.s32.totalorder %s24, 0
      %p93 = por %p91, %p92
      %s95 = sadd.s32 %s94, 1
      %p98 = scmp.eq.s32.totalorder %s18, 1
      %p99 = scmp.ne.s32.totalorder %s94, %s96
      %p100 = scmp.eq.s32.totalorder %s18, 0
      %p101 = por %p99, %p100
      %p102 = scmp.ne.s32.totalorder %s94, %s96
      %p103 = scmp.eq.s32.totalorder %s23, 1
      %p104 = por %p102, %p103
      %p105 = scmp.ne.s32.totalorder %s96, %s97
      %p106 = scmp.eq.s32.totalorder %s23, 0
      %p107 = por %p105, %p106
      %p108 = scmp.ne.s32.totalorder %s96, %s97
      %p109 = scmp.eq.s32.totalorder %s24, 1
      %p110 = por %p108, %p109
      %p112 = scmp.ne.s32.totalorder %s97, %s111
      %p113 = scmp.eq.s32.totalorder %s24, 0
      %p114 = por %p112, %p113
      %s116 = sadd.s32 %s115, 1
      %p119 = scmp.eq.s32.totalorder %s18, 1
      %p120 = scmp.ne.s32.totalorder %s115, %s117
      %p121 = scmp.eq.s32.totalorder %s18, 0
      %p122 = por %p120, %p121
      %p123 = scmp.ne.s32.totalorder %s115, %s117
      %p124 = scmp.eq.s32.totalorder %s23, 1
      %p125 = por %p123, %p124
      %p126 = scmp.ne.s32.totalorder %s117, %s118
      %p127 = scmp.eq.s32.totalorder %s23, 0
      %p128 = por %p126, %p127
      %p129 = scmp.ne.s32.totalorder %s117, %s118
      %p130 = scmp.eq.s32.totalorder %s24, 1
      %p131 = por %p129, %p130
      %p133 = scmp.ne.s32.totalorder %s118, %s132
      %p134 = scmp.eq.s32.totalorder %s24, 0
      %p135 = por %p133, %p134
      %s136 = ssub.s32 %s18, %s25
      %p137 = scmp.eq.s32.totalorder %s136, 0
      %s139 = sadd.s32 %s138, 1
      %s140 = scalar_select %p137, %s138, %s139
      %p143 = pneg %p137
      %p144 = scmp.eq.s32.totalorder %s18, 1
      %p145 = por %p143, %p144
      %p146 = scmp.ne.s32.totalorder %s138, %s141
      %p147 = scmp.eq.s32.totalorder %s18, 0
      %p148 = por %p146, %p147
      %p149 = scmp.ne.s32.totalorder %s138, %s141
      %p150 = scmp.eq.s32.totalorder %s23, 1
      %p151 = por %p149, %p150
      %p152 = scmp.ne.s32.totalorder %s141, %s142
      %p153 = scmp.eq.s32.totalorder %s23, 0
      %p154 = por %p152, %p153
      %p155 = scmp.ne.s32.totalorder %s141, %s142
      %p156 = scmp.eq.s32.totalorder %s24, 1
      %p157 = por %p155, %p156
      %p159 = scmp.ne.s32.totalorder %s142, %s158
      %p160 = scmp.eq.s32.totalorder %s24, 0
      %p161 = por %p159, %p160
      %p162 = scmp.le.s32.totalorder 1, %s18
      %p163 = scmp.lt.s32.totalorder %s18, 3
      %p164 = pnand %p162, %p163
      %p165 = pneg %p164
      // Predicated region
      $region9: #{tpu_custom_call.1} parent=5 // pred_check
        _
      $region10: #{tpu_custom_call.1} parent=5 // pred_check_branch
        %167 = sbr.rel (%p164) target = $region12
      $region11: #{tpu_custom_call.1} parent=5 // pred_region
        %s168 = ssub.s32 %s18, 1
        // Predicated region
        $region13: #{tpu_custom_call.1} parent=11 // pred_check
          %p169 = pneg %p65
        $region14: #{tpu_custom_call.1} parent=11 // pred_check_branch
          %171 = sbr.rel (%p169) target = $region16
        $region15: #{tpu_custom_call.1} parent=11 // pred_region
          %s173 = ssub.s32 1024, 1024
          %174 = vsyncadd [#allocation6], %s173
          %s175 = sshll.u32 [#allocation5], 4
          %s176 = int_to_ptr.vmem [resolvable:$true] %s175
          %181 = dma.hbm_to_vmem [thread:$0]  %s1, 1024, %s176, [#allocation6], 64, 64, 4
        $region16: #{tpu_custom_call.1} parent=11 // pred_fallthru
          _
        // Predicated region
        $region17: #{tpu_custom_call.1} parent=11 // pred_check
          %p182 = pneg %p86
        $region18: #{tpu_custom_call.1} parent=11 // pred_check_branch
          %184 = sbr.rel (%p182) target = $region20
        $region19: #{tpu_custom_call.1} parent=11 // pred_region
          _
        $region20: #{tpu_custom_call.1} parent=11 // pred_fallthru
          _
        // Predicated region
        $region21: #{tpu_custom_call.1} parent=11 // pred_check
          %p185 = pneg %p107
        $region22: #{tpu_custom_call.1} parent=11 // pred_check_branch
          %187 = sbr.rel (%p185) target = $region24
        $region23: #{tpu_custom_call.1} parent=11 // pred_region
          %s189 = ssub.s32 1024, 1024
          %190 = vsyncadd [#allocation6], %s189
          %s191 = sshll.u32 [#allocation7], 4
          %s192 = int_to_ptr.vmem [resolvable:$true] %s191
          %197 = dma.hbm_to_vmem [thread:$0]  %s3, 1024, %s192, [#allocation6], 64, 64, 4
        $region24: #{tpu_custom_call.1} parent=11 // pred_fallthru
          _
        // Predicated region
        $region25: #{tpu_custom_call.1} parent=11 // pred_check
          %p198 = pneg %p128
        $region26: #{tpu_custom_call.1} parent=11 // pred_check_branch
          %200 = sbr.rel (%p198) target = $region28
        $region27: #{tpu_custom_call.1} parent=11 // pred_region
          _
        $region28: #{tpu_custom_call.1} parent=11 // pred_fallthru
          _
      $region12: #{tpu_custom_call.1} parent=5 // pred_fallthru
        _
      %p201 = scmp.lt.s32.totalorder %s18, 2
      // Predicated region
      $region29: #{tpu_custom_call.1} parent=5 // pred_check
        %p202 = pneg %p201
      $region30: #{tpu_custom_call.1} parent=5 // pred_check_branch
        %204 = sbr.rel (%p202) target = $region32
      $region31: #{tpu_custom_call.1} parent=5 // pred_region
        // Predicated region
        $region33: #{tpu_custom_call.1} parent=31 // pred_check
          %p205 = pneg %p38
        $region34: #{tpu_custom_call.1} parent=31 // pred_check_branch
          %207 = sbr.rel (%p205) target = $region36
        $region35: #{tpu_custom_call.1} parent=31 // pred_region
          %s208 = sand.u32 %s28, 1
          %s209 = scalar_lea.sflag [#allocation3], %s208
          %s210 = sand.u32 %s28, 1
          %s211 = smul.addr %s210, 16
          %s212 = scalar_lea.vmem [#allocation2], %s211
          %s213 = smul.u32 4, %s18
          %s214 = ssub.s32 6, %s213
          %p215 = scmp.lt.s32.totalorder %s214, 4
          %s216 = scalar_select %p215, %s214, 4
          %s217 = smul.u32 64, %s216
          %s219 = ssub.s32 256, %s217
          %220 = vsyncadd %s209, %s219
          %p221 = scmp.ne.s32.totalorder 0, %s217
          %s222 = smul.addr %s213, 64
          %s223 = scalar_lea.hbm %s0, %s222
          %s224 = smul.u32 4, %s216
          %s225 = sshll.u32 %s212, 4
          %s226 = int_to_ptr.vmem [resolvable:$true] %s225
          %s227 = sshll.u32 %s224, 4
          %231 = dma.hbm_to_vmem [thread:$0]  (%p221), %s223, %s227, %s226, %s209, 64, 64, 4
        $region36: #{tpu_custom_call.1} parent=31 // pred_fallthru
          _
      $region32: #{tpu_custom_call.1} parent=5 // pred_fallthru
        _
      %p232 = scmp.le.s32.totalorder 1, %s18
      %p233 = scmp.lt.s32.totalorder %s18, 3
      %p234 = pnand %p232, %p233
      %p235 = pneg %p234
      // Predicated region
      $region37: #{tpu_custom_call.1} parent=5 // pred_check
        _
      $region38: #{tpu_custom_call.1} parent=5 // pred_check_branch
        %237 = sbr.rel (%p234) target = $region40
      $region39: #{tpu_custom_call.1} parent=5 // pred_region
        %s238 = ssub.s32 %s18, 1
        %s239 = sand.u32 %s31, 1
        %s240 = scalar_lea.sflag [#allocation3], %s239
        %s241 = sand.u32 %s31, 1
        %s242 = smul.addr %s241, 16
        %s243 = scalar_lea.vmem [#allocation2], %s242
        // Predicated region
        $region41: #{tpu_custom_call.1} parent=39 // pred_check
          %p244 = pneg %p44
        $region42: #{tpu_custom_call.1} parent=39 // pred_check_branch
          %246 = sbr.rel (%p244) target = $region44
        $region43: #{tpu_custom_call.1} parent=39 // pred_region
          %247 = dma.done %s240, 256
        $region44: #{tpu_custom_call.1} parent=39 // pred_fallthru
          _
        // Predicated region
        $region45: #{tpu_custom_call.1} parent=39 // pred_check
          %p248 = pneg %p65
        $region46: #{tpu_custom_call.1} parent=39 // pred_check_branch
          %250 = sbr.rel (%p248) target = $region48
        $region47: #{tpu_custom_call.1} parent=39 // pred_region
          %251 = dma.done [#allocation6], 1024
        $region48: #{tpu_custom_call.1} parent=39 // pred_fallthru
          _
        // Predicated region
        $region49: #{tpu_custom_call.1} parent=39 // pred_check
          %p252 = pneg %p107
        $region50: #{tpu_custom_call.1} parent=39 // pred_check_branch
          %254 = sbr.rel (%p252) target = $region52
        $region51: #{tpu_custom_call.1} parent=39 // pred_region
          %255 = dma.done [#allocation6], 1024
        $region52: #{tpu_custom_call.1} parent=39 // pred_fallthru
          _
        %s256 = sand.u32 %s31, 1
        %s257 = scalar_lea.sflag [#allocation3], %s256
        %s258 = sand.u32 %s31, 1
        %s259 = smul.addr %s258, 16
        %s260 = scalar_lea.vmem [#allocation2], %s259
        %p261 = pneg %p44
        %p262 = pneg %p41
        %p263 = pneg %p65
        %p264 = pneg %p62
        %p265 = pneg %p86
        %p266 = pneg %p83
        %p267 = pneg %p107
        %p268 = pneg %p104
        %p269 = pneg %p128
        %p270 = pneg %p125
        %p271 = pneg %p154
        %p272 = pneg %p151
        %s273 = sand.u32 %s141, 1
        %s274 = scalar_lea.sflag [#allocation4], %s273
        %s275 = sand.u32 %s141, 1
        %s276 = smul.addr %s275, 16
        %s277 = scalar_lea.vmem [#allocation8], %s276
        %s278 = smul.u32 4, %s23
        %s279 = ssub.s32 6, %s278
        %p280 = scmp.lt.s32.totalorder %s279, 4
        %s281 = scalar_select %p280, %s279, 4
        %s282 = smul.u32 64, %s281
        %s283 = smul.u32 4, %s23
        %s284 = ssub.s32 6, %s283
        %p285 = scmp.lt.s32.totalorder %s284, 4
        %s286 = scalar_select %p285, %s284, 4
        %s287 = smul.u32 64, %s286
        %v289 = vld [vmem:[%s243] sm:$0xf]
        %v290 = vld [vmem:[%s243 + $0x4] sm:$0xf]
        %v291 = vld [vmem:[%s243 + $0x8] sm:$0xf]
        %v292 = vld [vmem:[%s243 + $0xc] sm:$0xf]
        %v293 = vld [vmem:[#allocation5] sm:$0xf]
        %v294 = vld [vmem:[#allocation5 + $0x4] sm:$0xf]
        %v295 = vld [vmem:[#allocation5 + $0x8] sm:$0xf]
        %v296 = vld [vmem:[#allocation5 + $0xc] sm:$0xf]
        %v297 = vld [vmem:[#allocation5 + $0x10] sm:$0xf]
        %v298 = vld [vmem:[#allocation5 + $0x14] sm:$0xf]
        %v299 = vld [vmem:[#allocation5 + $0x18] sm:$0xf]
        %v300 = vld [vmem:[#allocation5 + $0x1c] sm:$0xf]
        %v301 = vld [vmem:[#allocation5 + $0x20] sm:$0xf]
        %v302 = vld [vmem:[#allocation5 + $0x24] sm:$0xf]
        %v303 = vld [vmem:[#allocation5 + $0x28] sm:$0xf]
        %v304 = vld [vmem:[#allocation5 + $0x2c] sm:$0xf]
        %v305 = vld [vmem:[#allocation5 + $0x30] sm:$0xf]
        %v306 = vld [vmem:[#allocation5 + $0x34] sm:$0xf]
        %v307 = vld [vmem:[#allocation5 + $0x38] sm:$0xf]
        %v308 = vld [vmem:[#allocation5 + $0x3c] sm:$0xf]
        %v309 = vld [vmem:[%s2] sm:$0x1]
        %v311 = vlaneseq
        %v312 = vshrl.u32 %v311, 7
        %v313 = vsub.s32 0, %v312
        %v314 = vrot.slane %v309, %v313
        %v320 = vunpack.c.l.b16 %v289
        %v321 = vunpack.c.l.b16 %v290
        %v322 = vunpack.c.l.b16 %v291
        %v323 = vunpack.c.l.b16 %v292
        %v324 = vpack.c.b16 %v321, %v320
        %v325 = vpack.c.b16 %v323, %v322
        %v344 = vunpack.c.l.b16 %v293
        %v345 = vunpack.c.l.b16 %v294
        %v346 = vunpack.c.l.b16 %v295
        %v347 = vunpack.c.l.b16 %v296
        %v348 = vunpack.c.l.b16 %v297
        %v349 = vunpack.c.l.b16 %v298
        %v350 = vunpack.c.l.b16 %v299
        %v351 = vunpack.c.l.b16 %v300
        %v352 = vunpack.c.l.b16 %v301
        %v353 = vunpack.c.l.b16 %v302
        %v354 = vunpack.c.l.b16 %v303
        %v355 = vunpack.c.l.b16 %v304
        %v356 = vunpack.c.l.b16 %v305
        %v357 = vunpack.c.l.b16 %v306
        %v358 = vunpack.c.l.b16 %v307
        %v359 = vunpack.c.l.b16 %v308
        %v360 = vpack.c.b16 %v345, %v344
        %v361 = vpack.c.b16 %v347, %v346
        %v362 = vpack.c.b16 %v349, %v348
        %v363 = vpack.c.b16 %v351, %v350
        %v364 = vpack.c.b16 %v353, %v352
        %v365 = vpack.c.b16 %v355, %v354
        %v366 = vpack.c.b16 %v357, %v356
        %v367 = vpack.c.b16 %v359, %v358
        %376 = vmatprep.subr.bf16.mxu0 0
        %377 = vmatpush1.bf16.msra.mxu0 %v367
        %378 = vmatprep.subr.bf16.mxu0 0
        %379 = vmatpush1.bf16.msra.mxu0 %v366
        %380 = vmatprep.subr.bf16.mxu0 0
        %381 = vmatpush1.bf16.msra.mxu0 %v365
        %382 = vmatprep.subr.bf16.mxu0 0
        %383 = vmatpush1.bf16.msra.mxu0 %v364
        %384 = vmatprep.subr.bf16.mxu0 0
        %385 = vmatpush1.bf16.msra.mxu0 %v363
        %386 = vmatprep.subr.bf16.mxu0 0
        %387 = vmatpush1.bf16.msra.mxu0 %v362
        %388 = vmatprep.subr.bf16.mxu0 0
        %389 = vmatpush1.bf16.msra.mxu0 %v361
        %390 = vmatprep.subr.bf16.mxu0 0
        %391 = vmatpush1.bf16.msra.mxu0 %v360
        %392 = vmatprep.subr.bf16.mxu0 0
        %393 = vmatpush2.bf16.msra.mxu0 0
        %394 = vmatprep.subr.bf16.mxu0 0
        %395 = vmatpush2.bf16.msra.mxu0 0
        %396 = vmatprep.subr.bf16.mxu0 0
        %397 = vmatpush2.bf16.msra.mxu0 0
        %398 = vmatprep.subr.bf16.mxu0 0
        %399 = vmatpush2.bf16.msra.mxu0 0
        %400 = vmatprep.subr.bf16.mxu0 0
        %401 = vmatpush2.bf16.msra.mxu0 0
        %402 = vmatprep.subr.bf16.mxu0 0
        %403 = vmatpush2.bf16.msra.mxu0 0
        %404 = vmatprep.subr.bf16.mxu0 0
        %405 = vmatpush2.bf16.msra.mxu0 0
        %406 = vmatprep.subr.bf16.mxu0 0
        %407 = vmatpush2.bf16.msra.mxu0 0
        %408 = vmatprep.mubr.bf16.mxu0 0
        %409 = vmatmul.mubr.bf16.gmra.mxu0 %v324
        %v410 = vpop.f32.mrf.mxu0
        %v411 = vadd.f32 %v314, %v410
        %v412 = vpop.f32.mrf.mxu0
        %v413 = vpop.f32.mrf.mxu0
        %v414 = vadd.f32 %v314, %v413
        %v415 = vpop.f32.mrf.mxu0
        %416 = vmatprep.mubr.bf16.mxu0 0
        %417 = vmatmul.mubr.bf16.gmra.mxu0 %v325
        %v418 = vpop.f32.mrf.mxu0
        %v419 = vadd.f32 %v314, %v418
        %v420 = vpop.f32.mrf.mxu0
        %v421 = vpop.f32.mrf.mxu0
        %v422 = vadd.f32 %v314, %v421
        %v423 = vpop.f32.mrf.mxu0
        %424 = vdwg.mxu0
        %v425 = vxor.u32 %v411, 2147483648
        %v426 = vxor.u32 %v414, 2147483648
        %v427 = vxor.u32 %v419, 2147483648
        %v428 = vxor.u32 %v422, 2147483648
        %v429 = vmul.f32 %v425, 1.442695
        %v430 = vpow.pop %v429
        %v431 = vmul.f32 %v426, 1.442695
        %v432 = vpow.pop %v431
        %v433 = vmul.f32 %v427, 1.442695
        %v434 = vpow.pop %v433
        %v435 = vmul.f32 %v428, 1.442695
        %v436 = vpow.pop %v435
        %v437 = vadd.f32 %v430, 1.0
        %v438 = vadd.f32 %v432, 1.0
        %v439 = vadd.f32 %v434, 1.0
        %v440 = vadd.f32 %v436, 1.0
        %v441 = vrcp.pop %v437
        %v442 = vmul.f32 1.0, %v441
        %v443 = vrcp.pop %v438
        %v444 = vmul.f32 1.0, %v443
        %v445 = vrcp.pop %v439
        %v446 = vmul.f32 1.0, %v445
        %v447 = vrcp.pop %v440
        %v448 = vmul.f32 1.0, %v447
        %v449 = vmul.f32 %v411, %v442
        %v450 = vmul.f32 %v414, %v444
        %v451 = vmul.f32 %v419, %v446
        %v452 = vmul.f32 %v422, %v448
        %v453 = vpack.c.bf16 %v450, %v449
        %v454 = vpack.c.bf16 %v452, %v451
        %v455 = vmul.bf16 %v453, %v324
        %v456 = vmul.bf16 %v454, %v325
        %v457 = vld [vmem:[#allocation7] sm:$0xf]
        %v458 = vld [vmem:[#allocation7 + $0x4] sm:$0xf]
        %v459 = vld [vmem:[#allocation7 + $0x8] sm:$0xf]
        %v460 = vld [vmem:[#allocation7 + $0xc] sm:$0xf]
        %v461 = vld [vmem:[#allocation7 + $0x10] sm:$0xf]
        %v462 = vld [vmem:[#allocation7 + $0x14] sm:$0xf]
        %v463 = vld [vmem:[#allocation7 + $0x18] sm:$0xf]
        %v464 = vld [vmem:[#allocation7 + $0x1c] sm:$0xf]
        %v465 = vld [vmem:[#allocation7 + $0x20] sm:$0xf]
        %v466 = vld [vmem:[#allocation7 + $0x24] sm:$0xf]
        %v467 = vld [vmem:[#allocation7 + $0x28] sm:$0xf]
        %v468 = vld [vmem:[#allocation7 + $0x2c] sm:$0xf]
        %v469 = vld [vmem:[#allocation7 + $0x30] sm:$0xf]
        %v470 = vld [vmem:[#allocation7 + $0x34] sm:$0xf]
        %v471 = vld [vmem:[#allocation7 + $0x38] sm:$0xf]
        %v472 = vld [vmem:[#allocation7 + $0x3c] sm:$0xf]
        %v473 = vld [vmem:[%s4] sm:$0x1]
        %v475 = vlaneseq
        %v476 = vshrl.u32 %v475, 7
        %v477 = vsub.s32 0, %v476
        %v478 = vrot.slane %v473, %v477
        %v496 = vunpack.c.l.b16 %v457
        %v497 = vunpack.c.l.b16 %v458
        %v498 = vunpack.c.l.b16 %v459
        %v499 = vunpack.c.l.b16 %v460
        %v500 = vunpack.c.l.b16 %v461
        %v501 = vunpack.c.l.b16 %v462
        %v502 = vunpack.c.l.b16 %v463
        %v503 = vunpack.c.l.b16 %v464
        %v504 = vunpack.c.l.b16 %v465
        %v505 = vunpack.c.l.b16 %v466
        %v506 = vunpack.c.l.b16 %v467
        %v507 = vunpack.c.l.b16 %v468
        %v508 = vunpack.c.l.b16 %v469
        %v509 = vunpack.c.l.b16 %v470
        %v510 = vunpack.c.l.b16 %v471
        %v511 = vunpack.c.l.b16 %v472
        %v512 = vpack.c.b16 %v497, %v496
        %v513 = vpack.c.b16 %v499, %v498
        %v514 = vpack.c.b16 %v501, %v500
        %v515 = vpack.c.b16 %v503, %v502
        %v516 = vpack.c.b16 %v505, %v504
        %v517 = vpack.c.b16 %v507, %v506
        %v518 = vpack.c.b16 %v509, %v508
        %v519 = vpack.c.b16 %v511, %v510
        %528 = vmatprep.subr.bf16.mxu0 0
        %529 = vmatpush1.bf16.msra.mxu0 %v519
        %530 = vmatprep.subr.bf16.mxu0 0
        %531 = vmatpush1.bf16.msra.mxu0 %v518
        %532 = vmatprep.subr.bf16.mxu0 0
        %533 = vmatpush1.bf16.msra.mxu0 %v517
        %534 = vmatprep.subr.bf16.mxu0 0
        %535 = vmatpush1.bf16.msra.mxu0 %v516
        %536 = vmatprep.subr.bf16.mxu0 0
        %537 = vmatpush1.bf16.msra.mxu0 %v515
        %538 = vmatprep.subr.bf16.mxu0 0
        %539 = vmatpush1.bf16.msra.mxu0 %v514
        %540 = vmatprep.subr.bf16.mxu0 0
        %541 = vmatpush1.bf16.msra.mxu0 %v513
        %542 = vmatprep.subr.bf16.mxu0 0
        %543 = vmatpush1.bf16.msra.mxu0 %v512
        %544 = vmatprep.subr.bf16.mxu0 0
        %545 = vmatpush2.bf16.msra.mxu0 0
        %546 = vmatprep.subr.bf16.mxu0 0
        %547 = vmatpush2.bf16.msra.mxu0 0
        %548 = vmatprep.subr.bf16.mxu0 0
        %549 = vmatpush2.bf16.msra.mxu0 0
        %550 = vmatprep.subr.bf16.mxu0 0
        %551 = vmatpush2.bf16.msra.mxu0 0
        %552 = vmatprep.subr.bf16.mxu0 0
        %553 = vmatpush2.bf16.msra.mxu0 0
        %554 = vmatprep.subr.bf16.mxu0 0
        %555 = vmatpush2.bf16.msra.mxu0 0
        %556 = vmatprep.subr.bf16.mxu0 0
        %557 = vmatpush2.bf16.msra.mxu0 0
        %558 = vmatprep.subr.bf16.mxu0 0
        %559 = vmatpush2.bf16.msra.mxu0 0
        %560 = vmatprep.mubr.bf16.mxu0 0
        %561 = vmatmul.mubr.bf16.gmra.mxu0 %v455
        %v562 = vpop.f32.mrf.mxu0
        %v563 = vadd.f32 %v478, %v562
        %v564 = vpop.f32.mrf.mxu0
        %v565 = vpop.f32.mrf.mxu0
        %v566 = vadd.f32 %v478, %v565
        %v567 = vpop.f32.mrf.mxu0
        %568 = vmatprep.mubr.bf16.mxu0 0
        %569 = vmatmul.mubr.bf16.gmra.mxu0 %v456
        %v570 = vpop.f32.mrf.mxu0
        %v571 = vadd.f32 %v478, %v570
        %v572 = vpop.f32.mrf.mxu0
        %v573 = vpop.f32.mrf.mxu0
        %v574 = vadd.f32 %v478, %v573
        %v575 = vpop.f32.mrf.mxu0
        %576 = vdwg.mxu0
        %v577 = vpack.c.bf16 %v566, %v563
        %v578 = vpack.c.bf16 %v574, %v571
        %v581 = vunpack.c.l.b16 %v577
        %v582 = vunpack.c.h.b16 %v577
        %v583 = vunpack.c.l.b16 %v578
        %v584 = vunpack.c.h.b16 %v578
        %v585 = vpack.c.b16 %v581, %v581
        %v586 = vpack.c.b16 %v582, %v582
        %v587 = vpack.c.b16 %v583, %v583
        %v588 = vpack.c.b16 %v584, %v584
        %593 = vst [vmem:[%s277] sm:$0xf] %v585
        %594 = vst [vmem:[%s277 + $0x4] sm:$0xf] %v586
        %595 = vst [vmem:[%s277 + $0x8] sm:$0xf] %v587
        %596 = vst [vmem:[%s277 + $0xc] sm:$0xf] %v588
        %s597 = sand.u32 %s141, 1
        %s598 = scalar_lea.sflag [#allocation4], %s597
        %s599 = sand.u32 %s141, 1
        %s600 = smul.addr %s599, 16
        %s601 = scalar_lea.vmem [#allocation8], %s600
        // Predicated region
        $region53: #{tpu_custom_call.1} parent=39 // pred_check
          %p602 = pneg %p151
        $region54: #{tpu_custom_call.1} parent=39 // pred_check_branch
          %604 = sbr.rel (%p602) target = $region56
        $region55: #{tpu_custom_call.1} parent=39 // pred_region
          %s605 = smul.u32 4, %s23
          %s606 = ssub.s32 6, %s605
          %p607 = scmp.lt.s32.totalorder %s606, 4
          %s608 = scalar_select %p607, %s606, 4
          %s609 = smul.u32 64, %s608
          %s611 = ssub.s32 256, %s609
          %612 = vsyncadd %s598, %s611
          %p613 = scmp.ne.s32.totalorder 0, %s609
          %s614 = smul.addr %s605, 64
          %s615 = scalar_lea.hbm %s5, %s614
          %s616 = smul.u32 4, %s608
          %s617 = sshll.u32 %s601, 4
          %s618 = int_to_ptr.vmem [resolvable:$true] %s617
          %s619 = sshll.u32 %s616, 4
          %623 = dma.vmem_to_hbm [thread:$0]  (%p613), %s618, %s619, %s615, %s598, 64, 64, 4
        $region56: #{tpu_custom_call.1} parent=39 // pred_fallthru
          _
      $region40: #{tpu_custom_call.1} parent=5 // pred_fallthru
        _
      %p624 = scmp.le.s32.totalorder 2, %s18
      // Predicated region
      $region57: #{tpu_custom_call.1} parent=5 // pred_check
        %p625 = pneg %p624
      $region58: #{tpu_custom_call.1} parent=5 // pred_check_branch
        %627 = sbr.rel (%p625) target = $region60
      $region59: #{tpu_custom_call.1} parent=5 // pred_region
        %s628 = ssub.s32 %s18, 2
        // Predicated region
        $region61: #{tpu_custom_call.1} parent=59 // pred_check
          %p629 = pneg %p157
        $region62: #{tpu_custom_call.1} parent=59 // pred_check_branch
          %631 = sbr.rel (%p629) target = $region64
        $region63: #{tpu_custom_call.1} parent=59 // pred_region
          %s632 = sand.u32 %s142, 1
          %s633 = scalar_lea.sflag [#allocation4], %s632
          %s634 = sand.u32 %s142, 1
          %s635 = smul.addr %s634, 16
          %s636 = scalar_lea.vmem [#allocation8], %s635
          %637 = dma.done %s633, 256
        $region64: #{tpu_custom_call.1} parent=59 // pred_fallthru
          _
      $region60: #{tpu_custom_call.1} parent=5 // pred_fallthru
        _
    $region6: #{tpu_custom_call.1} parent=1 // loop_footer
      %s22 = sadd.s32 1, %s18
    $region7: #{tpu_custom_call.1} parent=1 // loop_footer_branch
      %17 = sbr.rel target = $region3
    $region8: #{tpu_custom_call.1} parent=1 // loop_exit
      _
    %638 = vsyncpa [#allocation3], 1
    %s639 = scalar_lea.sflag [#allocation3], 1
    %640 = vsyncpa %s639, 1
    %641 = vsyncpa [#allocation6], 1
    %642 = vsyncpa [#allocation4], 1
    %s643 = scalar_lea.sflag [#allocation4], 1
    %644 = vsyncpa %s643, 1

// kernel: tpu_custom_call.1
$region0: #{tpu_custom_call.1}
  #allocation0 [shape = 'u32[]', space=smem, size = 0x4, offset = 0x4, fixed_abs, tag = 'smem constant byte address 0x4 - core index']
  #allocation1 [shape = 'u32[144,128]{1,0:T(1,128)}', space=vmem, size = 0x12000, scoped, tag = 'internal scratch']
  %s0 = inlined_call_operand.hbm [shape: bf16[48,128], index: 0, kind: input, shape index: {}]
  %s1 = inlined_call_operand.hbm [shape: bf16[128,128], index: 1, kind: input, shape index: {}]
  %s2 = inlined_call_operand.vmem [shape: f32[1,128], index: 2, kind: input, shape index: {}]
  %s3 = inlined_call_operand.hbm [shape: bf16[128,128], index: 3, kind: input, shape index: {}]
  %s4 = inlined_call_operand.vmem [shape: f32[1,128], index: 4, kind: input, shape index: {}]
  %s5 = inlined_call_operand.hbm [shape: bf16[48,128], index: 5, kind: output, shape index: {}]
  %s6 = sld [smem:[#allocation0]]
  $region65: #{tpu_custom_call.1} parent=0
    _
  %s8 = ssub.s32 1, %s6
  %s9 = scalar_select 0, %s8, %s6
  $region1: #{tpu_custom_call.1} parent=0
    #allocation2 [shape = 'u8[16384]{0}', space=vmem, size = 0x4000, scoped, tag = 'input window, operand 0']
    #allocation3 [shape = 's32[2]{0}', space=sflag, size = 0x8, scoped, tag = 'scoped memory for tpu_custom_call.1']
    #allocation4 [shape = 's32[2]{0}', space=sflag, size = 0x8, scoped, tag = 'scoped memory for tpu_custom_call.1']
    #allocation5 [shape = 'u8[32768]{0}', space=vmem, size = 0x8000, scoped, tag = 'input window, operand 1, single buffered']
    #allocation6 [shape = 's32[1]{0}', space=sflag, size = 0x4, scoped, tag = 'scoped memory for tpu_custom_call.1']
    #allocation7 [shape = 'u8[32768]{0}', space=vmem, size = 0x8000, scoped, tag = 'input window, operand 3, single buffered']
    #allocation8 [shape = 'u8[16384]{0}', space=vmem, size = 0x4000, scoped, tag = 'output window, operand 0']
    %10 = vsyncpa [#allocation3], 0
    %s11 = scalar_lea.sflag [#allocation3], 1
    %12 = vsyncpa %s11, 0
    %13 = vsyncpa [#allocation6], 0
    %14 = vsyncpa [#allocation4], 0
    %s15 = scalar_lea.sflag [#allocation4], 1
    %16 = vsyncpa %s15, 0
    loop: start=0, step=1, limit=4
    $region2: #{tpu_custom_call.1} parent=1 // loop_pre_header
      _
    $region3: #{tpu_custom_call.1} parent=1 // loop_header
      %s18 = sphi 0, %s22
      %p19 = scmp.ge.s32.totalorder %s18, 4
      %s28 = sphi 0, %s30
      %s31 = sphi 0, %s28
      %s32 = sphi 0, %s31
      %s48 = sphi 0, %s32
      %s52 = sphi 0, %s52
      %s54 = sphi 0, %s52
      %s55 = sphi 0, %s54
      %s69 = sphi 0, %s55
      %s73 = sphi 0, %s73
      %s75 = sphi 0, %s73
      %s76 = sphi 0, %s75
      %s90 = sphi 0, %s76
      %s94 = sphi 0, %s94
      %s96 = sphi 0, %s94
      %s97 = sphi 0, %s96
      %s111 = sphi 0, %s97
      %s115 = sphi 0, %s115
      %s117 = sphi 0, %s115
      %s118 = sphi 0, %s117
      %s132 = sphi 0, %s118
      %s138 = sphi 0, %s140
      %s141 = sphi 0, %s138
      %s142 = sphi 0, %s141
      %s158 = sphi 0, %s142
    $region4: #{tpu_custom_call.1} parent=1 // loop_header_branch
      %21 = sbr.rel (%p19) target = $region8
    $region5: #{tpu_custom_call.1} parent=1 // loop_body
      %s23 = ssub.s32 %s18, 1
      %s24 = ssub.s32 %s18, 2
      %s25 = sadd.s32 %s18, 1
      %s26 = ssub.s32 %s18, %s25
      %p27 = scmp.eq.s32.totalorder %s26, 0
      %s29 = sadd.s32 %s28, 1
      %s30 = scalar_select %p27, %s28, %s29
      %p33 = pneg %p27
      %p34 = scmp.eq.s32.totalorder %s18, 1
      %p35 = por %p33, %p34
      %p36 = scmp.ne.s32.totalorder %s28, %s31
      %p37 = scmp.eq.s32.totalorder %s18, 0
      %p38 = por %p36, %p37
      %p39 = scmp.ne.s32.totalorder %s28, %s31
      %p40 = scmp.eq.s32.totalorder %s23, 1
      %p41 = por %p39, %p40
      %p42 = scmp.ne.s32.totalorder %s31, %s32
      %p43 = scmp.eq.s32.totalorder %s23, 0
      %p44 = por %p42, %p43
      %p45 = scmp.ne.s32.totalorder %s31, %s32
      %p46 = scmp.eq.s32.totalorder %s24, 1
      %p47 = por %p45, %p46
      %p49 = scmp.ne.s32.totalorder %s32, %s48
      %p50 = scmp.eq.s32.totalorder %s24, 0
      %p51 = por %p49, %p50
      %s53 = sadd.s32 %s52, 1
      %p56 = scmp.eq.s32.totalorder %s18, 1
      %p57 = scmp.ne.s32.totalorder %s52, %s54
      %p58 = scmp.eq.s32.totalorder %s18, 0
      %p59 = por %p57, %p58
      %p60 = scmp.ne.s32.totalorder %s52, %s54
      %p61 = scmp.eq.s32.totalorder %s23, 1
      %p62 = por %p60, %p61
      %p63 = scmp.ne.s32.totalorder %s54, %s55
      %p64 = scmp.eq.s32.totalorder %s23, 0
      %p65 = por %p63, %p64
      %p66 = scmp.ne.s32.totalorder %s54, %s55
      %p67 = scmp.eq.s32.totalorder %s24, 1
      %p68 = por %p66, %p67
      %p70 = scmp.ne.s32.totalorder %s55, %s69
      %p71 = scmp.eq.s32.totalorder %s24, 0
      %p72 = por %p70, %p71
      %s74 = sadd.s32 %s73, 1
      %p77 = scmp.eq.s32.totalorder %s18, 1
      %p78 = scmp.ne.s32.totalorder %s73, %s75
      %p79 = scmp.eq.s32.totalorder %s18, 0
      %p80 = por %p78, %p79
      %p81 = scmp.ne.s32.totalorder %s73, %s75
      %p82 = scmp.eq.s32.totalorder %s23, 1
      %p83 = por %p81, %p82
      %p84 = scmp.ne.s32.totalorder %s75, %s76
      %p85 = scmp.eq.s32.totalorder %s23, 0
      %p86 = por %p84, %p85
      %p87 = scmp.ne.s32.totalorder %s75, %s76
      %p88 = scmp.eq.s32.totalorder %s24, 1
      %p89 = por %p87, %p88
      %p91 = scmp.ne.s32.totalorder %s76, %s90
      %p92 = scmp.eq.s32.totalorder %s24, 0
      %p93 = por %p91, %p92
      %s95 = sadd.s32 %s94, 1
      %p98 = scmp.eq.s32.totalorder %s18, 1
      %p99 = scmp.ne.s32.totalorder %s94, %s96
      %p100 = scmp.eq.s32.totalorder %s18, 0
      %p101 = por %p99, %p100
      %p102 = scmp.ne.s32.totalorder %s94, %s96
      %p103 = scmp.eq.s32.totalorder %s23, 1
      %p104 = por %p102, %p103
      %p105 = scmp.ne.s32.totalorder %s96, %s97
      %p106 = scmp.eq.s32.totalorder %s23, 0
      %p107 = por %p105, %p106
      %p108 = scmp.ne.s32.totalorder %s96, %s97
      %p109 = scmp.eq.s32.totalorder %s24, 1
      %p110 = por %p108, %p109
      %p112 = scmp.ne.s32.totalorder %s97, %s111
      %p113 = scmp.eq.s32.totalorder %s24, 0
      %p114 = por %p112, %p113
      %s116 = sadd.s32 %s115, 1
      %p119 = scmp.eq.s32.totalorder %s18, 1
      %p120 = scmp.ne.s32.totalorder %s115, %s117
      %p121 = scmp.eq.s32.totalorder %s18, 0
      %p122 = por %p120, %p121
      %p123 = scmp.ne.s32.totalorder %s115, %s117
      %p124 = scmp.eq.s32.totalorder %s23, 1
      %p125 = por %p123, %p124
      %p126 = scmp.ne.s32.totalorder %s117, %s118
      %p127 = scmp.eq.s32.totalorder %s23, 0
      %p128 = por %p126, %p127
      %p129 = scmp.ne.s32.totalorder %s117, %s118
      %p130 = scmp.eq.s32.totalorder %s24, 1
      %p131 = por %p129, %p130
      %p133 = scmp.ne.s32.totalorder %s118, %s132
      %p134 = scmp.eq.s32.totalorder %s24, 0
      %p135 = por %p133, %p134
      %s136 = ssub.s32 %s18, %s25
      %p137 = scmp.eq.s32.totalorder %s136, 0
      %s139 = sadd.s32 %s138, 1
      %s140 = scalar_select %p137, %s138, %s139
      %p143 = pneg %p137
      %p144 = scmp.eq.s32.totalorder %s18, 1
      %p145 = por %p143, %p144
      %p146 = scmp.ne.s32.totalorder %s138, %s141
      %p147 = scmp.eq.s32.totalorder %s18, 0
      %p148 = por %p146, %p147
      %p149 = scmp.ne.s32.totalorder %s138, %s141
      %p150 = scmp.eq.s32.totalorder %s23, 1
      %p151 = por %p149, %p150
      %p152 = scmp.ne.s32.totalorder %s141, %s142
      %p153 = scmp.eq.s32.totalorder %s23, 0
      %p154 = por %p152, %p153
      %p155 = scmp.ne.s32.totalorder %s141, %s142
      %p156 = scmp.eq.s32.totalorder %s24, 1
      %p157 = por %p155, %p156
      %p159 = scmp.ne.s32.totalorder %s142, %s158
      %p160 = scmp.eq.s32.totalorder %s24, 0
      %p161 = por %p159, %p160
      %p162 = scmp.le.s32.totalorder 1, %s18
      %p163 = scmp.lt.s32.totalorder %s18, 3
      %p164 = pnand %p162, %p163
      %p165 = pneg %p164
      // Predicated region
      $region9: #{tpu_custom_call.1} parent=5 // pred_check
        _
      $region10: #{tpu_custom_call.1} parent=5 // pred_check_branch
        %167 = sbr.rel (%p164) target = $region12
      $region11: #{tpu_custom_call.1} parent=5 // pred_region
        %s168 = ssub.s32 %s18, 1
        // Predicated region
        $region13: #{tpu_custom_call.1} parent=11 // pred_check
          %p169 = pneg %p65
        $region14: #{tpu_custom_call.1} parent=11 // pred_check_branch
          %171 = sbr.rel (%p169) target = $region16
        $region15: #{tpu_custom_call.1} parent=11 // pred_region
          %s173 = ssub.s32 1024, 1024
          %174 = vsyncadd [#allocation6], %s173
          %s175 = sshll.u32 [#allocation5], 4
          %s176 = int_to_ptr.vmem [resolvable:$true] %s175
          %181 = dma.hbm_to_vmem [thread:$0]  %s1, 1024, %s176, [#allocation6], 64, 64, 4
        $region16: #{tpu_custom_call.1} parent=11 // pred_fallthru
          _
        // Predicated region
        $region17: #{tpu_custom_call.1} parent=11 // pred_check
          %p182 = pneg %p86
        $region18: #{tpu_custom_call.1} parent=11 // pred_check_branch
          %184 = sbr.rel (%p182) target = $region20
        $region19: #{tpu_custom_call.1} parent=11 // pred_region
          _
        $region20: #{tpu_custom_call.1} parent=11 // pred_fallthru
          _
        // Predicated region
        $region21: #{tpu_custom_call.1} parent=11 // pred_check
          %p185 = pneg %p107
        $region22: #{tpu_custom_call.1} parent=11 // pred_check_branch
          %187 = sbr.rel (%p185) target = $region24
        $region23: #{tpu_custom_call.1} parent=11 // pred_region
          %s189 = ssub.s32 1024, 1024
          %190 = vsyncadd [#allocation6], %s189
          %s191 = sshll.u32 [#allocation7], 4
          %s192 = int_to_ptr.vmem [resolvable:$true] %s191
          %197 = dma.hbm_to_vmem [thread:$0]  %s3, 1024, %s192, [#allocation6], 64, 64, 4
        $region24: #{tpu_custom_call.1} parent=11 // pred_fallthru
          _
        // Predicated region
        $region25: #{tpu_custom_call.1} parent=11 // pred_check
          %p198 = pneg %p128
        $region26: #{tpu_custom_call.1} parent=11 // pred_check_branch
          %200 = sbr.rel (%p198) target = $region28
        $region27: #{tpu_custom_call.1} parent=11 // pred_region
          _
        $region28: #{tpu_custom_call.1} parent=11 // pred_fallthru
          _
      $region12: #{tpu_custom_call.1} parent=5 // pred_fallthru
        _
      %p201 = scmp.lt.s32.totalorder %s18, 2
      // Predicated region
      $region29: #{tpu_custom_call.1} parent=5 // pred_check
        %p202 = pneg %p201
      $region30: #{tpu_custom_call.1} parent=5 // pred_check_branch
        %204 = sbr.rel (%p202) target = $region32
      $region31: #{tpu_custom_call.1} parent=5 // pred_region
        // Predicated region
        $region33: #{tpu_custom_call.1} parent=31 // pred_check
          %p205 = pneg %p38
        $region34: #{tpu_custom_call.1} parent=31 // pred_check_branch
          %207 = sbr.rel (%p205) target = $region36
        $region35: #{tpu_custom_call.1} parent=31 // pred_region
          %s208 = sand.u32 %s28, 1
          %s209 = scalar_lea.sflag [#allocation3], %s208
          %s210 = sand.u32 %s28, 1
          %s211 = smul.addr %s210, 16
          %s212 = scalar_lea.vmem [#allocation2], %s211
          %s213 = smul.u32 4, %s18
          %s214 = ssub.s32 6, %s213
          %p215 = scmp.lt.s32.totalorder %s214, 4
          %s216 = scalar_select %p215, %s214, 4
          %s217 = smul.u32 64, %s216
          %s219 = ssub.s32 256, %s217
          %220 = vsyncadd %s209, %s219
          %p221 = scmp.ne.s32.totalorder 0, %s217
          %s222 = smul.addr %s213, 64
          %s223 = scalar_lea.hbm %s0, %s222
          %s224 = smul.u32 4, %s216
          %s225 = sshll.u32 %s212, 4
          %s226 = int_to_ptr.vmem [resolvable:$true] %s225
          %s227 = sshll.u32 %s224, 4
          %231 = dma.hbm_to_vmem [thread:$0]  (%p221), %s223, %s227, %s226, %s209, 64, 64, 4
        $region36: #{tpu_custom_call.1} parent=31 // pred_fallthru
          _
      $region32: #{tpu_custom_call.1} parent=5 // pred_fallthru
        _
      %p232 = scmp.le.s32.totalorder 1, %s18
      %p233 = scmp.lt.s32.totalorder %s18, 3
      %p234 = pnand %p232, %p233
      %p235 = pneg %p234
      // Predicated region
      $region37: #{tpu_custom_call.1} parent=5 // pred_check
        _
      $region38: #{tpu_custom_call.1} parent=5 // pred_check_branch
        %237 = sbr.rel (%p234) target = $region40
      $region39: #{tpu_custom_call.1} parent=5 // pred_region
        %s238 = ssub.s32 %s18, 1
        %s239 = sand.u32 %s31, 1
        %s240 = scalar_lea.sflag [#allocation3], %s239
        %s241 = sand.u32 %s31, 1
        %s242 = smul.addr %s241, 16
        %s243 = scalar_lea.vmem [#allocation2], %s242
        // Predicated region
        $region41: #{tpu_custom_call.1} parent=39 // pred_check
          %p244 = pneg %p44
        $region42: #{tpu_custom_call.1} parent=39 // pred_check_branch
          %246 = sbr.rel (%p244) target = $region44
        $region43: #{tpu_custom_call.1} parent=39 // pred_region
          %247 = dma.done %s240, 256
        $region44: #{tpu_custom_call.1} parent=39 // pred_fallthru
          _
        // Predicated region
        $region45: #{tpu_custom_call.1} parent=39 // pred_check
          %p248 = pneg %p65
        $region46: #{tpu_custom_call.1} parent=39 // pred_check_branch
          %250 = sbr.rel (%p248) target = $region48
        $region47: #{tpu_custom_call.1} parent=39 // pred_region
          %251 = dma.done [#allocation6], 1024
        $region48: #{tpu_custom_call.1} parent=39 // pred_fallthru
          _
        // Predicated region
        $region49: #{tpu_custom_call.1} parent=39 // pred_check
          %p252 = pneg %p107
        $region50: #{tpu_custom_call.1} parent=39 // pred_check_branch
          %254 = sbr.rel (%p252) target = $region52
        $region51: #{tpu_custom_call.1} parent=39 // pred_region
          %255 = dma.done [#allocation6], 1024
        $region52: #{tpu_custom_call.1} parent=39 // pred_fallthru
          _
        %s256 = sand.u32 %s31, 1
        %s257 = scalar_lea.sflag [#allocation3], %s256
        %s258 = sand.u32 %s31, 1
        %s259 = smul.addr %s258, 16
        %s260 = scalar_lea.vmem [#allocation2], %s259
        %p261 = pneg %p44
        %p262 = pneg %p41
        %p263 = pneg %p65
        %p264 = pneg %p62
        %p265 = pneg %p86
        %p266 = pneg %p83
        %p267 = pneg %p107
        %p268 = pneg %p104
        %p269 = pneg %p128
        %p270 = pneg %p125
        %p271 = pneg %p154
        %p272 = pneg %p151
        %s273 = sand.u32 %s141, 1
        %s274 = scalar_lea.sflag [#allocation4], %s273
        %s275 = sand.u32 %s141, 1
        %s276 = smul.addr %s275, 16
        %s277 = scalar_lea.vmem [#allocation8], %s276
        %s278 = smul.u32 4, %s23
        %s279 = ssub.s32 6, %s278
        %p280 = scmp.lt.s32.totalorder %s279, 4
        %s281 = scalar_select %p280, %s279, 4
        %s282 = smul.u32 64, %s281
        %s283 = smul.u32 4, %s23
        %s284 = ssub.s32 6, %s283
        %p285 = scmp.lt.s32.totalorder %s284, 4
        %s286 = scalar_select %p285, %s284, 4
        %s287 = smul.u32 64, %s286
        %v289 = vld [vmem:[%s243] sm:$0xf]
        %v290 = vld [vmem:[%s243 + $0x4] sm:$0xf]
        %v291 = vld [vmem:[%s243 + $0x8] sm:$0xf]
        %v292 = vld [vmem:[%s243 + $0xc] sm:$0xf]
        %v293 = vld [vmem:[#allocation5] sm:$0xf]
        %v294 = vld [vmem:[#allocation5 + $0x4] sm:$0xf]
        %v295 = vld [vmem:[#allocation5 + $0x8] sm:$0xf]
        %v296 = vld [vmem:[#allocation5 + $0xc] sm:$0xf]
        %v297 = vld [vmem:[#allocation5 + $0x10] sm:$0xf]
        %v298 = vld [vmem:[#allocation5 + $0x14] sm:$0xf]
        %v299 = vld [vmem:[#allocation5 + $0x18] sm:$0xf]
        %v300 = vld [vmem:[#allocation5 + $0x1c] sm:$0xf]
        %v301 = vld [vmem:[#allocation5 + $0x20] sm:$0xf]
        %v302 = vld [vmem:[#allocation5 + $0x24] sm:$0xf]
        %v303 = vld [vmem:[#allocation5 + $0x28] sm:$0xf]
        %v304 = vld [vmem:[#allocation5 + $0x2c] sm:$0xf]
        %v305 = vld [vmem:[#allocation5 + $0x30] sm:$0xf]
        %v306 = vld [vmem:[#allocation5 + $0x34] sm:$0xf]
        %v307 = vld [vmem:[#allocation5 + $0x38] sm:$0xf]
        %v308 = vld [vmem:[#allocation5 + $0x3c] sm:$0xf]
        %v309 = vld [vmem:[%s2] sm:$0x1]
        %v311 = vlaneseq
        %v312 = vshrl.u32 %v311, 7
        %v313 = vsub.s32 0, %v312
        %v314 = vrot.slane %v309, %v313
        %v320 = vunpack.c.l.b16 %v289
        %v321 = vunpack.c.l.b16 %v290
        %v322 = vunpack.c.l.b16 %v291
        %v323 = vunpack.c.l.b16 %v292
        %v324 = vpack.c.b16 %v321, %v320
        %v325 = vpack.c.b16 %v323, %v322
        %v344 = vunpack.c.l.b16 %v293
        %v345 = vunpack.c.l.b16 %v294
        %v346 = vunpack.c.l.b16 %v295
        %v347 = vunpack.c.l.b16 %v296
        %v348 = vunpack.c.l.b16 %v297
        %v349 = vunpack.c.l.b16 %v298
        %v350 = vunpack.c.l.b16 %v299
        %v351 = vunpack.c.l.b16 %v300
        %v352 = vunpack.c.l.b16 %v301
        %v353 = vunpack.c.l.b16 %v302
        %v354 = vunpack.c.l.b16 %v303
        %v355 = vunpack.c.l.b16 %v304
        %v356 = vunpack.c.l.b16 %v305
        %v357 = vunpack.c.l.b16 %v306
        %v358 = vunpack.c.l.b16 %v307
        %v359 = vunpack.c.l.b16 %v308
        %v360 = vpack.c.b16 %v345, %v344
        %v361 = vpack.c.b16 %v347, %v346
        %v362 = vpack.c.b16 %v349, %v348
        %v363 = vpack.c.b16 %v351, %v350
        %v364 = vpack.c.b16 %v353, %v352
        %v365 = vpack.c.b16 %v355, %v354
        %v366 = vpack.c.b16 %v357, %v356
        %v367 = vpack.c.b16 %v359, %v358
        %376 = vmatprep.subr.bf16.mxu0 0
        %377 = vmatpush1.bf16.msra.mxu0 %v367
        %378 = vmatprep.subr.bf16.mxu0 0
        %379 = vmatpush1.bf16.msra.mxu0 %v366
        %380 = vmatprep.subr.bf16.mxu0 0
        %381 = vmatpush1.bf16.msra.mxu0 %v365
        %382 = vmatprep.subr.bf16.mxu0 0
        %383 = vmatpush1.bf16.msra.mxu0 %v364
        %384 = vmatprep.subr.bf16.mxu0 0
        %385 = vmatpush1.bf16.msra.mxu0 %v363
        %386 = vmatprep.subr.bf16.mxu0 0
        %387 = vmatpush1.bf16.msra.mxu0 %v362
        %388 = vmatprep.subr.bf16.mxu0 0
        %389 = vmatpush1.bf16.msra.mxu0 %v361
        %390 = vmatprep.subr.bf16.mxu0 0
        %391 = vmatpush1.bf16.msra.mxu0 %v360
        %392 = vmatprep.subr.bf16.mxu0 0
        %393 = vmatpush2.bf16.msra.mxu0 0
        %394 = vmatprep.subr.bf16.mxu0 0
        %395 = vmatpush2.bf16.msra.mxu0 0
        %396 = vmatprep.subr.bf16.mxu0 0
        %397 = vmatpush2.bf16.msra.mxu0 0
        %398 = vmatprep.subr.bf16.mxu0 0
        %399 = vmatpush2.bf16.msra.mxu0 0
        %400 = vmatprep.subr.bf16.mxu0 0
        %401 = vmatpush2.bf16.msra.mxu0 0
        %402 = vmatprep.subr.bf16.mxu0 0
        %403 = vmatpush2.bf16.msra.mxu0 0
        %404 = vmatprep.subr.bf16.mxu0 0
        %405 = vmatpush2.bf16.msra.mxu0 0
        %406 = vmatprep.subr.bf16.mxu0 0
        %407 = vmatpush2.bf16.msra.mxu0 0
        %408 = vmatprep.mubr.bf16.mxu0 0
        %409 = vmatmul.mubr.bf16.gmra.mxu0 %v324
        %v410 = vpop.f32.mrf.mxu0
        %v411 = vadd.f32 %v314, %v410
        %v412 = vpop.f32.mrf.mxu0
        %v413 = vpop.f32.mrf.mxu0
        %v414 = vadd.f32 %v314, %v413
        %v415 = vpop.f32.mrf.mxu0
        %416 = vmatprep.mubr.bf16.mxu0 0
        %417 = vmatmul.mubr.bf16.gmra.mxu0 %v325
        %v418 = vpop.f32.mrf.mxu0
        %v419 = vadd.f32 %v314, %v418
        %v420 = vpop.f32.mrf.mxu0
        %v421 = vpop.f32.mrf.mxu0
        %v422 = vadd.f32 %v314, %v421
        %v423 = vpop.f32.mrf.mxu0
        %424 = vdwg.mxu0
        %v425 = vxor.u32 %v411, 2147483648
        %v426 = vxor.u32 %v414, 2147483648
        %v427 = vxor.u32 %v419, 2147483648
        %v428 = vxor.u32 %v422, 2147483648
        %v429 = vmul.f32 %v425, 1.442695
        %v430 = vpow.pop %v429
        %v431 = vmul.f32 %v426, 1.442695
        %v432 = vpow.pop %v431
        %v433 = vmul.f32 %v427, 1.442695
        %v434 = vpow.pop %v433
        %v435 = vmul.f32 %v428, 1.442695
        %v436 = vpow.pop %v435
        %v437 = vadd.f32 %v430, 1.0
        %v438 = vadd.f32 %v432, 1.0
        %v439 = vadd.f32 %v434, 1.0
        %v440 = vadd.f32 %v436, 1.0
        %v441 = vrcp.pop %v437
        %v442 = vmul.f32 1.0, %v441
        %v443 = vrcp.pop %v438
        %v444 = vmul.f32 1.0, %v443
        %v445 = vrcp.pop %v439
        %v446 = vmul.f32 1.0, %v445
        %v447 = vrcp.pop %v440
        %v448 = vmul.f32 1.0, %v447
        %v449 = vmul.f32 %v411, %v442
        %v450 = vmul.f32 %v414, %v444
        %v451 = vmul.f32 %v419, %v446
        %v452 = vmul.f32 %v422, %v448
        %v453 = vpack.c.bf16 %v450, %v449
        %v454 = vpack.c.bf16 %v452, %v451
        %v455 = vmul.bf16 %v453, %v324
        %v456 = vmul.bf16 %v454, %v325
        %v457 = vld [vmem:[#allocation7] sm:$0xf]
        %v458 = vld [vmem:[#allocation7 + $0x4] sm:$0xf]
        %v459 = vld [vmem:[#allocation7 + $0x8] sm:$0xf]
        %v460 = vld [vmem:[#allocation7 + $0xc] sm:$0xf]
        %v461 = vld [vmem:[#allocation7 + $0x10] sm:$0xf]
        %v462 = vld [vmem:[#allocation7 + $0x14] sm:$0xf]
        %v463 = vld [vmem:[#allocation7 + $0x18] sm:$0xf]
        %v464 = vld [vmem:[#allocation7 + $0x1c] sm:$0xf]
        %v465 = vld [vmem:[#allocation7 + $0x20] sm:$0xf]
        %v466 = vld [vmem:[#allocation7 + $0x24] sm:$0xf]
        %v467 = vld [vmem:[#allocation7 + $0x28] sm:$0xf]
        %v468 = vld [vmem:[#allocation7 + $0x2c] sm:$0xf]
        %v469 = vld [vmem:[#allocation7 + $0x30] sm:$0xf]
        %v470 = vld [vmem:[#allocation7 + $0x34] sm:$0xf]
        %v471 = vld [vmem:[#allocation7 + $0x38] sm:$0xf]
        %v472 = vld [vmem:[#allocation7 + $0x3c] sm:$0xf]
        %v473 = vld [vmem:[%s4] sm:$0x1]
        %v475 = vlaneseq
        %v476 = vshrl.u32 %v475, 7
        %v477 = vsub.s32 0, %v476
        %v478 = vrot.slane %v473, %v477
        %v496 = vunpack.c.l.b16 %v457
        %v497 = vunpack.c.l.b16 %v458
        %v498 = vunpack.c.l.b16 %v459
        %v499 = vunpack.c.l.b16 %v460
        %v500 = vunpack.c.l.b16 %v461
        %v501 = vunpack.c.l.b16 %v462
        %v502 = vunpack.c.l.b16 %v463
        %v503 = vunpack.c.l.b16 %v464
        %v504 = vunpack.c.l.b16 %v465
        %v505 = vunpack.c.l.b16 %v466
        %v506 = vunpack.c.l.b16 %v467
        %v507 = vunpack.c.l.b16 %v468
        %v508 = vunpack.c.l.b16 %v469
        %v509 = vunpack.c.l.b16 %v470
        %v510 = vunpack.c.l.b16 %v471
        %v511 = vunpack.c.l.b16 %v472
        %v512 = vpack.c.b16 %v497, %v496
        %v513 = vpack.c.b16 %v499, %v498
        %v514 = vpack.c.b16 %v501, %v500
        %v515 = vpack.c.b16 %v503, %v502
        %v516 = vpack.c.b16 %v505, %v504
        %v517 = vpack.c.b16 %v507, %v506
        %v518 = vpack.c.b16 %v509, %v508
        %v519 = vpack.c.b16 %v511, %v510
        %528 = vmatprep.subr.bf16.mxu0 0
        %529 = vmatpush1.bf16.msra.mxu0 %v519
        %530 = vmatprep.subr.bf16.mxu0 0
        %531 = vmatpush1.bf16.msra.mxu0 %v518
        %532 = vmatprep.subr.bf16.mxu0 0
        %533 = vmatpush1.bf16.msra.mxu0 %v517
        %534 = vmatprep.subr.bf16.mxu0 0
        %535 = vmatpush1.bf16.msra.mxu0 %v516
        %536 = vmatprep.subr.bf16.mxu0 0
        %537 = vmatpush1.bf16.msra.mxu0 %v515
        %538 = vmatprep.subr.bf16.mxu0 0
        %539 = vmatpush1.bf16.msra.mxu0 %v514
        %540 = vmatprep.subr.bf16.mxu0 0
        %541 = vmatpush1.bf16.msra.mxu0 %v513
        %542 = vmatprep.subr.bf16.mxu0 0
        %543 = vmatpush1.bf16.msra.mxu0 %v512
        %544 = vmatprep.subr.bf16.mxu0 0
        %545 = vmatpush2.bf16.msra.mxu0 0
        %546 = vmatprep.subr.bf16.mxu0 0
        %547 = vmatpush2.bf16.msra.mxu0 0
        %548 = vmatprep.subr.bf16.mxu0 0
        %549 = vmatpush2.bf16.msra.mxu0 0
        %550 = vmatprep.subr.bf16.mxu0 0
        %551 = vmatpush2.bf16.msra.mxu0 0
        %552 = vmatprep.subr.bf16.mxu0 0
        %553 = vmatpush2.bf16.msra.mxu0 0
        %554 = vmatprep.subr.bf16.mxu0 0
        %555 = vmatpush2.bf16.msra.mxu0 0
        %556 = vmatprep.subr.bf16.mxu0 0
        %557 = vmatpush2.bf16.msra.mxu0 0
        %558 = vmatprep.subr.bf16.mxu0 0
        %559 = vmatpush2.bf16.msra.mxu0 0
        %560 = vmatprep.mubr.bf16.mxu0 0
        %561 = vmatmul.mubr.bf16.gmra.mxu0 %v455
        %v562 = vpop.f32.mrf.mxu0
        %v563 = vadd.f32 %v478, %v562
        %v564 = vpop.f32.mrf.mxu0
        %v565 = vpop.f32.mrf.mxu0
        %v566 = vadd.f32 %v478, %v565
        %v567 = vpop.f32.mrf.mxu0
        %568 = vmatprep.mubr.bf16.mxu0 0
        %569 = vmatmul.mubr.bf16.gmra.mxu0 %v456
        %v570 = vpop.f32.mrf.mxu0
        %v571 = vadd.f32 %v478, %v570
        %v572 = vpop.f32.mrf.mxu0
        %v573 = vpop.f32.mrf.mxu0
        %v574 = vadd.f32 %v478, %v573
        %v575 = vpop.f32.mrf.mxu0
        %576 = vdwg.mxu0
        %v577 = vpack.c.bf16 %v566, %v563
        %v578 = vpack.c.bf16 %v574, %v571
        %v581 = vunpack.c.l.b16 %v577
        %v582 = vunpack.c.h.b16 %v577
        %v583 = vunpack.c.l.b16 %v578
        %v584 = vunpack.c.h.b16 %v578
        %v585 = vpack.c.b16 %v581, %v581
        %v586 = vpack.c.b16 %v582, %v582
        %v587 = vpack.c.b16 %v583, %v583
        %v588 = vpack.c.b16 %v584, %v584
        %593 = vst [vmem:[%s277] sm:$0xf] %v585
        %594 = vst [vmem:[%s277 + $0x4] sm:$0xf] %v586
        %595 = vst [vmem:[%s277 + $0x8] sm:$0xf] %v587
        %596 = vst [vmem:[%s277 + $0xc] sm:$0xf] %v588
        %s597 = sand.u32 %s141, 1
        %s598 = scalar_lea.sflag [#allocation4], %s597
        %s599 = sand.u32 %s141, 1
        %s600 = smul.addr %s599, 16
        %s601 = scalar_lea.vmem [#allocation8], %s600
        // Predicated region
        $region53: #{tpu_custom_call.1} parent=39 // pred_check
          %p602 = pneg %p151
        $region54: #{tpu_custom_call.1} parent=39 // pred_check_branch
          %604 = sbr.rel (%p602) target = $region56
        $region55: #{tpu_custom_call.1} parent=39 // pred_region
          %s605 = smul.u32 4, %s23
          %s606 = ssub.s32 6, %s605
          %p607 = scmp.lt.s32.totalorder %s606, 4
          %s608 = scalar_select %p607, %s606, 4
          %s609 = smul.u32 64, %s608
          %s611 = ssub.s32 256, %s609
          %612 = vsyncadd %s598, %s611
          %p613 = scmp.ne.s32.totalorder 0, %s609
          %s614 = smul.addr %s605, 64
          %s615 = scalar_lea.hbm %s5, %s614
          %s616 = smul.u32 4, %s608
          %s617 = sshll.u32 %s601, 4
          %s618 = int_to_ptr.vmem [resolvable:$true] %s617
          %s619 = sshll.u32 %s616, 4
          %623 = dma.vmem_to_hbm [thread:$0]  (%p613), %s618, %s619, %s615, %s598, 64, 64, 4
        $region56: #{tpu_custom_call.1} parent=39 // pred_fallthru
          _
      $region40: #{tpu_custom_call.1} parent=5 // pred_fallthru
        _
      %p624 = scmp.le.s32.totalorder 2, %s18
      // Predicated region
      $region57: #{tpu_custom_call.1} parent=5 // pred_check
        %p625 = pneg %p624
      $region58: #{tpu_custom_call.1} parent=5 // pred_check_branch
        %627 = sbr.rel (%p625) target = $region60
      $region59: #{tpu_custom_call.1} parent=5 // pred_region
        %s628 = ssub.s32 %s18, 2
        // Predicated region
        $region61: #{tpu_custom_call.1} parent=59 // pred_check
          %p629 = pneg %p157
        $region62: #{tpu_custom_call.1} parent=59 // pred_check_branch
          %631 = sbr.rel (%p629) target = $region64
        $region63: #{tpu_custom_call.1} parent=59 // pred_region
          %s632 = sand.u32 %s142, 1
          %s633 = scalar_lea.sflag [#allocation4], %s632
          %s634 = sand.u32 %s142, 1
          %s635 = smul.addr %s634, 16
          %s636 = scalar_lea.vmem [#allocation8], %s635
          %637 = dma.done %s633, 256
        $region64: #{tpu_custom_call.1} parent=59 // pred_fallthru
          _
      $region60: #{tpu_custom_call.1} parent=5 // pred_fallthru
        _
    $region6: #{tpu_custom_call.1} parent=1 // loop_footer
      %s22 = sadd.s32 1, %s18
    $region7: #{tpu_custom_call.1} parent=1 // loop_footer_branch
      %17 = sbr.rel target = $region3
    $region8: #{tpu_custom_call.1} parent=1 // loop_exit
      _
    %638 = vsyncpa [#allocation3], 1
    %s639 = scalar_lea.sflag [#allocation3], 1
    %640 = vsyncpa %s639, 1
    %641 = vsyncpa [#allocation6], 1
    %642 = vsyncpa [#allocation4], 1
    %s643 = scalar_lea.sflag [#allocation4], 1
    %644 = vsyncpa %s643, 1

</llo_original>
